<compile_context>
chip_gen: v6e
topology: v6e:2x2x1
jax: 0.10.0
libtpu: 0.0.40
codegen_flags: <defaults>
</compile_context>

<pallas_src>
import jax
import jax.numpy as jnp
from jax.experimental import pallas as pl
from jax.experimental.pallas import tpu as pltpu


NEG_SLOPE = 0.01   # nn.LeakyReLU default negative_slope
LANE = 128
SUBLANE = 8


def _round_up(n, m):
    return ((n + m - 1) // m) * m


def _lrelu(v):
    return jnp.where(v >= 0, v, NEG_SLOPE * v)


def ermirm_kernel(x_ref, w1_ref, b1_ref, w3_ref, b3_ref, o_ref):
    # fc1 + LeakyReLU:  h = lrelu(x @ W1t + b1)
    # Cast x to the weight compute dtype inside the kernel (VPU op) so the
    # wrapper never writes a casted copy of x back to HBM.
    xv = x_ref[...].astype(w1_ref.dtype)
    h = jnp.dot(xv, w1_ref[...], preferred_element_type=jnp.float32)
    h = _lrelu(h + b1_ref[...])                       # f32 epilogue (v5e-safe)

    # fc3:  out = h @ W3t + b3   (f32 accumulation, f32 bias add)
    o = jnp.dot(h.astype(w3_ref.dtype), w3_ref[...],
                preferred_element_type=jnp.float32)
    o_ref[...] = (o + b3_ref[...]).astype(o_ref.dtype)


def _xavier_uniform(key, fan_out, fan_in, dtype=jnp.float32):
    # matches torch.nn.init.xavier_uniform_ for a (out, in) weight
    bound = (6.0 / (fan_in + fan_out)) ** 0.5
    return jax.random.uniform(
        key, (fan_out, fan_in), minval=-bound, maxval=bound, dtype=dtype
    )


def init_ermirm_params(key, insize, hsize, outsize):
    """Deterministic xavier-uniform weights, zero biases (as in __init__)."""
    k1, k2, k3 = jax.random.split(key, 3)
    return {
        "fc1": (_xavier_uniform(k1, hsize, insize), jnp.zeros((hsize,), jnp.float32)),
        # fc2 exists in __init__ but is unused by forward(); kept for parity.
        "fc2": (_xavier_uniform(k2, hsize, hsize), jnp.zeros((hsize,), jnp.float32)),
        "fc3": (_xavier_uniform(k3, outsize, hsize), jnp.zeros((outsize,), jnp.float32)),
    }
    # TODO(synk): nn.Dropout(0.2) is a no-op here because forward() never calls it.


def prepare_ermirm_params(params, compute_dtype=jnp.bfloat16):
    """One-time param prep: transpose, cast, and lane-pad the weights/biases.

    hsize / outsize are zero-padded up to multiples of 128 so both matmul N/K
    dims and the kernel's output last dim are lane-dense; the padded output
    columns are exactly zero and are sliced off in `ermirm_forward`.
    """
    w1, b1 = params["fc1"]        # (hsize, insize), (hsize,)
    w3, b3 = params["fc3"]        # (outsize, hsize), (outsize,)
    hsize, insize = w1.shape
    outsize = w3.shape[0]
    hsize_p = _round_up(hsize, LANE)
    outsize_p = _round_up(outsize, LANE)

    w1t = jnp.zeros((insize, hsize_p), compute_dtype)
    w1t = w1t.at[:, :hsize].set(w1.T.astype(compute_dtype))
    b1r = jnp.zeros((1, hsize_p), jnp.float32)
    b1r = b1r.at[:, :hsize].set(b1.reshape(1, hsize).astype(jnp.float32))
    w3t = jnp.zeros((hsize_p, outsize_p), compute_dtype)
    w3t = w3t.at[:hsize, :outsize].set(w3.T.astype(compute_dtype))
    b3r = jnp.zeros((1, outsize_p), jnp.float32)
    b3r = b3r.at[:, :outsize].set(b3.reshape(1, outsize).astype(jnp.float32))

    return {
        "w1t": w1t, "b1": b1r, "w3t": w3t, "b3": b3r,
        "insize": insize, "hsize": hsize, "outsize": outsize,
    }


def ermirm_forward(x, prepped, insize, *, tm=256):
    """Fused Pallas forward of ERMIRM.  Returns (B, outsize) float32.

    `prepped` comes from `prepare_ermirm_params` (pre-transposed / pre-cast /
    lane-padded weights — call it once, not per forward).
    """
    w1t, b1r, w3t, b3r = prepped["w1t"], prepped["b1"], prepped["w3t"], prepped["b3"]
    outsize = prepped["outsize"]
    assert prepped["insize"] == insize
    hsize_p = w1t.shape[1]
    outsize_p = w3t.shape[1]

    x2 = x.reshape(-1, insize)          # no dtype cast here; kernel casts on VPU
    B = x2.shape[0]

    # Batch tile: multiple of 8 sublanes.  Cap so the grid has >=4 steps when
    # B allows it (megacore split + DMA/compute overlap); tm=256 keeps the
    # footprint inside v7x's 64 MiB VMEM.
    # TODO(synk): sweep tm up to 512-1024 on v5e/v6e (128 MiB VMEM).
    tm_eff = max(SUBLANE, min(tm, _round_up(pl.cdiv(B, 4), SUBLANE)))
    grid = (pl.cdiv(B, tm_eff),)

    x_bytes = jnp.dtype(x2.dtype).itemsize
    w_bytes = jnp.dtype(w1t.dtype).itemsize
    resident = ((insize * hsize_p + hsize_p * outsize_p) * w_bytes
                + (hsize_p + outsize_p) * 4)
    per_step = (tm_eff * insize * x_bytes       # x tile
                + tm_eff * outsize_p * 4        # out tile
                + tm_eff * hsize_p * 4)         # h intermediate (f32)
    needed = 2 * resident + 2 * per_step        # double-buffered
    vmem_limit = int(min(64 * 1024 * 1024, max(32 * 1024 * 1024, 2 * needed)))

    cost = pl.CostEstimate(
        flops=int(2 * B * (insize * hsize_p + hsize_p * outsize_p)),
        transcendentals=0,
        bytes_accessed=int(B * insize * x_bytes + B * outsize_p * 4 + resident),
    )

    out = pl.pallas_call(
        ermirm_kernel,
        out_shape=jax.ShapeDtypeStruct((B, outsize_p), jnp.float32),
        grid_spec=pltpu.PrefetchScalarGridSpec(
            num_scalar_prefetch=0,
            grid=grid,
            in_specs=[
                # activations: tiled over the batch grid axis (ragged last
                # block is masked on writeback; rows are independent).
                pl.BlockSpec((tm_eff, insize), lambda i: (i, 0)),
                # weights / biases: full-array, grid-invariant, stay resident.
                # TODO(synk): single-buffer these (pl.Buffered(1)) to halve the
                # resident weight VMEM on v7x once pipeline_mode support on
                # top-level pallas_call BlockSpecs is confirmed stable.
                pl.BlockSpec((insize, hsize_p), lambda i: (0, 0)),
                pl.BlockSpec((1, hsize_p), lambda i: (0, 0)),
                pl.BlockSpec((hsize_p, outsize_p), lambda i: (0, 0)),
                pl.BlockSpec((1, outsize_p), lambda i: (0, 0)),
            ],
            out_specs=pl.BlockSpec((tm_eff, outsize_p), lambda i: (i, 0)),
        ),
        compiler_params=pltpu.CompilerParams(
            dimension_semantics=("parallel",),    # megacore split on v7x
            vmem_limit_bytes=vmem_limit,
        ),
        cost_estimate=cost,
    )(x2, w1t, b1r, w3t, b3r)

    # TODO(synk): for very large layers on v7x (weights > ~half VMEM), add an
    # "arbitrary" reduction grid axis over insize with a VMEM accumulator
    # instead of keeping both weight matrices fully resident.
    if outsize_p != outsize:
        out = out[:, :outsize]
    return out


def ermirm_reference(x, params, insize):
    """Pure-JAX reference matching the PyTorch forward exactly (f32)."""
    x2 = x.reshape(-1, insize).astype(jnp.float32)
    w1, b1 = params["fc1"]
    w3, b3 = params["fc3"]
    h = x2 @ w1.T + b1
    h = jnp.where(h >= 0, h, NEG_SLOPE * h)
    return h @ w3.T + b3


if __name__ == "__main__":
    # Small shapes consistent with the module: input is flattened to (-1, insize).
    insize, hsize, outsize = 16, 32, 16
    key = jax.random.PRNGKey(0)
    kx, kp = jax.random.split(key)

    # input x: (2, 4, 16) -> reshaped inside the wrapper to (8, 16)
    x = jax.random.normal(kx, (2, 4, 16), dtype=jnp.float32)
    params = init_ermirm_params(kp, insize, hsize, outsize)
    ref = ermirm_reference(x, params, insize)

    # f32 operand path: bit-faithful to the PyTorch reference.
    prep_f32 = prepare_ermirm_params(params, compute_dtype=jnp.float32)
    out_f32 = ermirm_forward(x, prep_f32, insize)
    jax.block_until_ready(out_f32)
    assert out_f32.shape == (8, outsize), out_f32.shape
    assert jnp.allclose(out_f32, ref, atol=1e-5, rtol=1e-5), (
        float(jnp.max(jnp.abs(out_f32 - ref)))
    )

    # Default bf16 operand path (MXU-native on v5e/v6e/v7x, f32 accumulation).
    prep_bf16 = prepare_ermirm_params(params)       # compute_dtype=bf16
    out_bf16 = ermirm_forward(x, prep_bf16, insize)
    jax.block_until_ready(out_bf16)
    assert out_bf16.shape == (8, outsize), out_bf16.shape
    assert jnp.allclose(out_bf16, ref, atol=5e-2, rtol=5e-2), (
        float(jnp.max(jnp.abs(out_bf16 - ref)))
    )

    print("KERNEL_OK")
</pallas_src>

<mosaic_0001>
module attributes {stable_mosaic.version = 11 : i64} {
  func.func @ermirm_kernel(%arg0: i32, %arg1: memref<8x16xf32, #tpu.memory_space<vmem>>, %arg2: memref<16x128xf32, #tpu.memory_space<vmem>>, %arg3: memref<1x128xf32, #tpu.memory_space<vmem>>, %arg4: memref<128x128xf32, #tpu.memory_space<vmem>>, %arg5: memref<1x128xf32, #tpu.memory_space<vmem>>, %arg6: memref<8x128xf32, #tpu.memory_space<vmem>>) attributes {dimension_semantics = [#tpu.dimension_semantics<parallel>], iteration_bounds = array<i64: 1>, scalar_prefetch = 0 : i64, scratch_operands = 0 : i64, tpu.core_type = #tpu.core_type<tc>, window_params = [{transform_indices = @transform_0, window_bounds = array<i64: 8, 16>}, {pipeline_mode = #tpu.pipeline_mode<synchronous>, transform_indices = @transform_1, window_bounds = array<i64: 16, 128>}, {pipeline_mode = #tpu.pipeline_mode<synchronous>, transform_indices = @transform_2, window_bounds = array<i64: 1, 128>}, {pipeline_mode = #tpu.pipeline_mode<synchronous>, transform_indices = @transform_3, window_bounds = array<i64: 128, 128>}, {pipeline_mode = #tpu.pipeline_mode<synchronous>, transform_indices = @transform_4, window_bounds = array<i64: 1, 128>}, {transform_indices = @transform_5, window_bounds = array<i64: 8, 128>}]} {
    %c0 = arith.constant 0 : index
    %c0_0 = arith.constant 0 : index
    %0 = vector.load %arg1[%c0, %c0_0] : memref<8x16xf32, #tpu.memory_space<vmem>>, vector<8x16xf32>
    %c0_1 = arith.constant 0 : index
    %c0_2 = arith.constant 0 : index
    %1 = vector.load %arg2[%c0_1, %c0_2] : memref<16x128xf32, #tpu.memory_space<vmem>>, vector<16x128xf32>
    %cst = arith.constant dense<0.000000e+00> : vector<8x128xf32>
    %2 = tpu.matmul %0, %1, %cst {dimension_numbers = #tpu.dot_dimension_numbers<[1], [0], [0], [1], [0, 0, 1, 1], [], []>} : vector<8x16xf32>, vector<16x128xf32>, vector<8x128xf32> -> vector<8x128xf32>
    %c0_3 = arith.constant 0 : index
    %c0_4 = arith.constant 0 : index
    %3 = vector.load %arg3[%c0_3, %c0_4] : memref<1x128xf32, #tpu.memory_space<vmem>>, vector<1x128xf32>
    %4 = vector.broadcast %3 : vector<1x128xf32> to vector<8x128xf32>
    %5 = arith.addf %2, %4 : vector<8x128xf32>
    %cst_5 = arith.constant 0.000000e+00 : f32
    %6 = vector.broadcast %cst_5 : f32 to vector<8x128xf32>
    %7 = arith.cmpf oge, %5, %6 : vector<8x128xf32>
    %cst_6 = arith.constant 0.00999999977 : f32
    %8 = vector.broadcast %cst_6 : f32 to vector<8x128xf32>
    %9 = arith.mulf %8, %5 : vector<8x128xf32>
    %10 = arith.select %7, %5, %9 : vector<8x128xi1>, vector<8x128xf32>
    %c0_7 = arith.constant 0 : index
    %c0_8 = arith.constant 0 : index
    %11 = vector.load %arg4[%c0_7, %c0_8] : memref<128x128xf32, #tpu.memory_space<vmem>>, vector<128x128xf32>
    %cst_9 = arith.constant dense<0.000000e+00> : vector<8x128xf32>
    %12 = tpu.matmul %10, %11, %cst_9 {dimension_numbers = #tpu.dot_dimension_numbers<[1], [0], [0], [1], [0, 0, 1, 1], [], []>} : vector<8x128xf32>, vector<128x128xf32>, vector<8x128xf32> -> vector<8x128xf32>
    %c0_10 = arith.constant 0 : index
    %c0_11 = arith.constant 0 : index
    %13 = vector.load %arg5[%c0_10, %c0_11] : memref<1x128xf32, #tpu.memory_space<vmem>>, vector<1x128xf32>
    %14 = vector.broadcast %13 : vector<1x128xf32> to vector<8x128xf32>
    %15 = arith.addf %12, %14 : vector<8x128xf32>
    %c0_12 = arith.constant 0 : index
    %c0_13 = arith.constant 0 : index
    %16 = vector.load %arg6[%c0_12, %c0_13] : memref<8x128xf32, #tpu.memory_space<vmem>>, vector<8x128xf32>
    tpu.vector_store %arg6[%c0_12, %c0_13], %15 {strides = array<i32>} : memref<8x128xf32, #tpu.memory_space<vmem>>, vector<8x128xf32>,
    return
  }
  func.func @transform_0(%arg0: i32) -> (i32, i32) {
    %c0_i32 = arith.constant 0 : i32
    %c0_i32_0 = arith.constant 0 : i32
    return %arg0, %c0_i32 : i32, i32
  }
  func.func @transform_1(%arg0: i32) -> (i32, i32) {
    %c0_i32 = arith.constant 0 : i32
    %c0_i32_0 = arith.constant 0 : i32
    %c0_i32_1 = arith.constant 0 : i32
    return %c0_i32, %c0_i32_0 : i32, i32
  }
  func.func @transform_2(%arg0: i32) -> (i32, i32) {
    %c0_i32 = arith.constant 0 : i32
    %c0_i32_0 = arith.constant 0 : i32
    %c0_i32_1 = arith.constant 0 : i32
    return %c0_i32, %c0_i32_0 : i32, i32
  }
  func.func @transform_3(%arg0: i32) -> (i32, i32) {
    %c0_i32 = arith.constant 0 : i32
    %c0_i32_0 = arith.constant 0 : i32
    %c0_i32_1 = arith.constant 0 : i32
    return %c0_i32, %c0_i32_0 : i32, i32
  }
  func.func @transform_4(%arg0: i32) -> (i32, i32) {
    %c0_i32 = arith.constant 0 : i32
    %c0_i32_0 = arith.constant 0 : i32
    %c0_i32_1 = arith.constant 0 : i32
    return %c0_i32, %c0_i32_0 : i32, i32
  }
  func.func @transform_5(%arg0: i32) -> (i32, i32) {
    %c0_i32 = arith.constant 0 : i32
    %c0_i32_0 = arith.constant 0 : i32
    return %arg0, %c0_i32 : i32, i32
  }
}

</mosaic_0001>

<llo_original>
// kernel: tpu_custom_call.1
$region0: #{tpu_custom_call.1}
  #allocation0 [shape = 'u32[]', space=smem, size = 0x4, offset = 0x4, fixed_abs, tag = 'smem constant byte address 0x4 - core index']
  #allocation1 [shape = 'u32[144,128]{1,0:T(1,128)}', space=vmem, size = 0x12000, scoped, tag = 'internal scratch']
  %s0 = inlined_call_operand.hbm [shape: f32[8,16], index: 0, kind: input, shape index: {}]
  %s1 = inlined_call_operand.hbm [shape: f32[16,128], index: 1, kind: input, shape index: {}]
  %s2 = inlined_call_operand.vmem [shape: f32[1,128], index: 2, kind: input, shape index: {}]
  %s3 = inlined_call_operand.hbm [shape: f32[128,128], index: 3, kind: input, shape index: {}]
  %s4 = inlined_call_operand.vmem [shape: f32[1,128], index: 4, kind: input, shape index: {}]
  %s5 = inlined_call_operand.hbm [shape: f32[8,128], index: 5, kind: output, shape index: {}]
  %s6 = sld [smem:[#allocation0]]
  $region42: #{tpu_custom_call.1} parent=0
    _
  %s8 = ssub.s32 1, %s6
  %s9 = scalar_select 0, %s8, %s6
  $region1: #{tpu_custom_call.1} parent=0
    #allocation2 [shape = 'u8[4096]{0}', space=vmem, size = 0x1000, scoped, tag = 'input window, operand 0, single buffered']
    #allocation3 [shape = 's32[1]{0}', space=sflag, size = 0x4, scoped, tag = 'scoped memory for tpu_custom_call.1']
    #allocation4 [shape = 's32[1]{0}', space=sflag, size = 0x4, scoped, tag = 'scoped memory for tpu_custom_call.1']
    #allocation5 [shape = 'u8[8192]{0}', space=vmem, size = 0x2000, scoped, tag = 'input window, operand 1, single buffered']
    #allocation6 [shape = 's32[1]{0}', space=sflag, size = 0x4, scoped, tag = 'scoped memory for tpu_custom_call.1']
    #allocation7 [shape = 'u8[65536]{0}', space=vmem, size = 0x10000, scoped, tag = 'input window, operand 3, single buffered']
    #allocation8 [shape = 'u8[4096]{0}', space=vmem, size = 0x1000, scoped, tag = 'output window, operand 0, single buffered']
    %10 = vsyncpa [#allocation3], 0
    %11 = vsyncpa [#allocation6], 0
    %12 = vsyncpa [#allocation4], 0
    // Predicated region
    $region2: #{tpu_custom_call.1} parent=1 // pred_check
      _
    $region3: #{tpu_custom_call.1} parent=1 // pred_check_branch
      %14 = sbr.rel (0) target = $region5
    $region4: #{tpu_custom_call.1} parent=1 // pred_region
      %s16 = ssub.s32 128, 128
      %17 = vsyncadd [#allocation3], %s16
      %s19 = sshll.u32 [#allocation2], 4
      %s20 = int_to_ptr.vmem [resolvable:$true] %s19
      %22 = dma.hbm_to_vmem [thread:$0]  %s0, 128, %s20, [#allocation3]
    $region5: #{tpu_custom_call.1} parent=1 // pred_fallthru
      _
    // Predicated region
    $region6: #{tpu_custom_call.1} parent=1 // pred_check
      _
    $region7: #{tpu_custom_call.1} parent=1 // pred_check_branch
      %24 = sbr.rel (0) target = $region9
    $region8: #{tpu_custom_call.1} parent=1 // pred_region
      %s26 = ssub.s32 256, 256
      %27 = vsyncadd [#allocation6], %s26
      %s28 = sshll.u32 [#allocation5], 4
      %s29 = int_to_ptr.vmem [resolvable:$true] %s28
      %34 = dma.hbm_to_vmem [thread:$0]  %s1, 256, %s29, [#allocation6], 128, 128, 8
    $region9: #{tpu_custom_call.1} parent=1 // pred_fallthru
      _
    // Predicated region
    $region10: #{tpu_custom_call.1} parent=1 // pred_check
      _
    $region11: #{tpu_custom_call.1} parent=1 // pred_check_branch
      %36 = sbr.rel (0) target = $region13
    $region12: #{tpu_custom_call.1} parent=1 // pred_region
      _
    $region13: #{tpu_custom_call.1} parent=1 // pred_fallthru
      _
    // Predicated region
    $region14: #{tpu_custom_call.1} parent=1 // pred_check
      _
    $region15: #{tpu_custom_call.1} parent=1 // pred_check_branch
      %38 = sbr.rel (0) target = $region17
    $region16: #{tpu_custom_call.1} parent=1 // pred_region
      %s40 = ssub.s32 2048, 2048
      %41 = vsyncadd [#allocation6], %s40
      %s42 = sshll.u32 [#allocation7], 4
      %s43 = int_to_ptr.vmem [resolvable:$true] %s42
      %48 = dma.hbm_to_vmem [thread:$0]  %s3, 2048, %s43, [#allocation6], 128, 128, 8
    $region17: #{tpu_custom_call.1} parent=1 // pred_fallthru
      _
    // Predicated region
    $region18: #{tpu_custom_call.1} parent=1 // pred_check
      _
    $region19: #{tpu_custom_call.1} parent=1 // pred_check_branch
      %50 = sbr.rel (0) target = $region21
    $region20: #{tpu_custom_call.1} parent=1 // pred_region
      _
    $region21: #{tpu_custom_call.1} parent=1 // pred_fallthru
      _
    // Predicated region
    $region22: #{tpu_custom_call.1} parent=1 // pred_check
      _
    $region23: #{tpu_custom_call.1} parent=1 // pred_check_branch
      %52 = sbr.rel (0) target = $region25
    $region24: #{tpu_custom_call.1} parent=1 // pred_region
      %53 = dma.done [#allocation3], 128
    $region25: #{tpu_custom_call.1} parent=1 // pred_fallthru
      _
    // Predicated region
    $region26: #{tpu_custom_call.1} parent=1 // pred_check
      _
    $region27: #{tpu_custom_call.1} parent=1 // pred_check_branch
      %55 = sbr.rel (0) target = $region29
    $region28: #{tpu_custom_call.1} parent=1 // pred_region
      %56 = dma.done [#allocation6], 256
    $region29: #{tpu_custom_call.1} parent=1 // pred_fallthru
      _
    // Predicated region
    $region30: #{tpu_custom_call.1} parent=1 // pred_check
      _
    $region31: #{tpu_custom_call.1} parent=1 // pred_check_branch
      %58 = sbr.rel (0) target = $region33
    $region32: #{tpu_custom_call.1} parent=1 // pred_region
      %59 = dma.done [#allocation6], 2048
    $region33: #{tpu_custom_call.1} parent=1 // pred_fallthru
      _
    %v60 = vld [vmem:[#allocation2] sm:$0xff]
    %v61 = vld [vmem:[#allocation5] sm:$0xff]
    %v62 = vld [vmem:[#allocation5 + $0x8] sm:$0xff]
    %v63 = vld [vmem:[%s2] sm:$0x1]
    %v65 = vlaneseq
    %v66 = vshrl.u32 %v65, 7
    %v67 = vsub.s32 0, %v66
    %v68 = vrot.slane %v63, %v67
    %vm70 = vcmask 130048
    %v72 = vsel %vm70, %v60, 0
    %74 = vmatprep.subr.mxu0 0.0
    %75 = vmatpush1.msra.mxu0 0.0
    %76 = vmatprep.subr.mxu0 0.0
    %77 = vmatpush1.msra.mxu0 0.0
    %78 = vmatprep.subr.mxu0 0.0
    %79 = vmatpush1.msra.mxu0 0.0
    %80 = vmatprep.subr.mxu0 0.0
    %81 = vmatpush1.msra.mxu0 0.0
    %82 = vmatprep.subr.mxu0 0.0
    %83 = vmatpush1.msra.mxu0 0.0
    %84 = vmatprep.subr.mxu0 0.0
    %85 = vmatpush1.msra.mxu0 0.0
    %86 = vmatprep.subr.mxu0 0.0
    %87 = vmatpush1.msra.mxu0 0.0
    %88 = vmatprep.subr.mxu0 0.0
    %89 = vmatpush1.msra.mxu0 0.0
    %90 = vmatprep.subr.mxu0 0.0
    %91 = vmatpush1.msra.mxu0 0.0
    %92 = vmatprep.subr.mxu0 0.0
    %93 = vmatpush1.msra.mxu0 0.0
    %94 = vmatprep.subr.mxu0 0.0
    %95 = vmatpush1.msra.mxu0 0.0
    %96 = vmatprep.subr.mxu0 0.0
    %97 = vmatpush1.msra.mxu0 0.0
    %98 = vmatprep.subr.mxu0 0.0
    %99 = vmatpush1.msra.mxu0 0.0
    %100 = vmatprep.subr.mxu0 0.0
    %101 = vmatpush1.msra.mxu0 0.0
    %102 = vmatprep.subr.mxu0 0.0
    %103 = vmatpush1.msra.mxu0 %v62
    %104 = vmatprep.subr.mxu0 0.0
    %105 = vmatpush1.msra.mxu0 %v61
    %106 = vmatprep.subr.mxu0 0.0
    %107 = vmatpush2.msra.mxu0 0.0
    %108 = vmatprep.subr.mxu0 0.0
    %109 = vmatpush2.msra.mxu0 0.0
    %110 = vmatprep.subr.mxu0 0.0
    %111 = vmatpush2.msra.mxu0 0.0
    %112 = vmatprep.subr.mxu0 0.0
    %113 = vmatpush2.msra.mxu0 0.0
    %114 = vmatprep.subr.mxu0 0.0
    %115 = vmatpush2.msra.mxu0 0.0
    %116 = vmatprep.subr.mxu0 0.0
    %117 = vmatpush2.msra.mxu0 0.0
    %118 = vmatprep.subr.mxu0 0.0
    %119 = vmatpush2.msra.mxu0 0.0
    %120 = vmatprep.subr.mxu0 0.0
    %121 = vmatpush2.msra.mxu0 0.0
    %122 = vmatprep.subr.mxu0 0.0
    %123 = vmatpush2.msra.mxu0 0.0
    %124 = vmatprep.subr.mxu0 0.0
    %125 = vmatpush2.msra.mxu0 0.0
    %126 = vmatprep.subr.mxu0 0.0
    %127 = vmatpush2.msra.mxu0 0.0
    %128 = vmatprep.subr.mxu0 0.0
    %129 = vmatpush2.msra.mxu0 0.0
    %130 = vmatprep.subr.mxu0 0.0
    %131 = vmatpush2.msra.mxu0 0.0
    %132 = vmatprep.subr.mxu0 0.0
    %133 = vmatpush2.msra.mxu0 0.0
    %134 = vmatprep.subr.mxu0 0.0
    %135 = vmatpush2.msra.mxu0 0.0
    %136 = vmatprep.subr.mxu0 0.0
    %137 = vmatpush2.msra.mxu0 0.0
    %138 = vmatprep.mubr.f32.mxu0 0.0
    %139 = vmatmul.mubr.f32.gmra.mxu0 %v72
    %v140 = vpop.f32.mrf.mxu0
    %v141 = vadd.f32 %v68, %v140
    %v142 = vpop.f32.mrf.mxu0
    %143 = vdwg.mxu0
    %vm144 = vcmp.ge.f32.partialorder %v141, 0.0
    %v145 = vmul.f32 %v141, 0.01
    %v146 = vsel %vm144, %v141, %v145
    %v147 = vld [vmem:[#allocation7] sm:$0xff]
    %v148 = vld [vmem:[#allocation7 + $0x8] sm:$0xff]
    %v149 = vld [vmem:[#allocation7 + $0x10] sm:$0xff]
    %v150 = vld [vmem:[#allocation7 + $0x18] sm:$0xff]
    %v151 = vld [vmem:[#allocation7 + $0x20] sm:$0xff]
    %v152 = vld [vmem:[#allocation7 + $0x28] sm:$0xff]
    %v153 = vld [vmem:[#allocation7 + $0x30] sm:$0xff]
    %v154 = vld [vmem:[#allocation7 + $0x38] sm:$0xff]
    %v155 = vld [vmem:[#allocation7 + $0x40] sm:$0xff]
    %v156 = vld [vmem:[#allocation7 + $0x48] sm:$0xff]
    %v157 = vld [vmem:[#allocation7 + $0x50] sm:$0xff]
    %v158 = vld [vmem:[#allocation7 + $0x58] sm:$0xff]
    %v159 = vld [vmem:[#allocation7 + $0x60] sm:$0xff]
    %v160 = vld [vmem:[#allocation7 + $0x68] sm:$0xff]
    %v161 = vld [vmem:[#allocation7 + $0x70] sm:$0xff]
    %v162 = vld [vmem:[#allocation7 + $0x78] sm:$0xff]
    %v163 = vld [vmem:[%s4] sm:$0x1]
    %v165 = vlaneseq
    %v166 = vshrl.u32 %v165, 7
    %v167 = vsub.s32 0, %v166
    %v168 = vrot.slane %v163, %v167
    %170 = vmatprep.subr.mxu0 0.0
    %171 = vmatpush1.msra.mxu0 %v162
    %172 = vmatprep.subr.mxu0 0.0
    %173 = vmatpush1.msra.mxu0 %v161
    %174 = vmatprep.subr.mxu0 0.0
    %175 = vmatpush1.msra.mxu0 %v160
    %176 = vmatprep.subr.mxu0 0.0
    %177 = vmatpush1.msra.mxu0 %v159
    %178 = vmatprep.subr.mxu0 0.0
    %179 = vmatpush1.msra.mxu0 %v158
    %180 = vmatprep.subr.mxu0 0.0
    %181 = vmatpush1.msra.mxu0 %v157
    %182 = vmatprep.subr.mxu0 0.0
    %183 = vmatpush1.msra.mxu0 %v156
    %184 = vmatprep.subr.mxu0 0.0
    %185 = vmatpush1.msra.mxu0 %v155
    %186 = vmatprep.subr.mxu0 0.0
    %187 = vmatpush1.msra.mxu0 %v154
    %188 = vmatprep.subr.mxu0 0.0
    %189 = vmatpush1.msra.mxu0 %v153
    %190 = vmatprep.subr.mxu0 0.0
    %191 = vmatpush1.msra.mxu0 %v152
    %192 = vmatprep.subr.mxu0 0.0
    %193 = vmatpush1.msra.mxu0 %v151
    %194 = vmatprep.subr.mxu0 0.0
    %195 = vmatpush1.msra.mxu0 %v150
    %196 = vmatprep.subr.mxu0 0.0
    %197 = vmatpush1.msra.mxu0 %v149
    %198 = vmatprep.subr.mxu0 0.0
    %199 = vmatpush1.msra.mxu0 %v148
    %200 = vmatprep.subr.mxu0 0.0
    %201 = vmatpush1.msra.mxu0 %v147
    %202 = vmatprep.subr.mxu0 0.0
    %203 = vmatpush2.msra.mxu0 0.0
    %204 = vmatprep.subr.mxu0 0.0
    %205 = vmatpush2.msra.mxu0 0.0
    %206 = vmatprep.subr.mxu0 0.0
    %207 = vmatpush2.msra.mxu0 0.0
    %208 = vmatprep.subr.mxu0 0.0
    %209 = vmatpush2.msra.mxu0 0.0
    %210 = vmatprep.subr.mxu0 0.0
    %211 = vmatpush2.msra.mxu0 0.0
    %212 = vmatprep.subr.mxu0 0.0
    %213 = vmatpush2.msra.mxu0 0.0
    %214 = vmatprep.subr.mxu0 0.0
    %215 = vmatpush2.msra.mxu0 0.0
    %216 = vmatprep.subr.mxu0 0.0
    %217 = vmatpush2.msra.mxu0 0.0
    %218 = vmatprep.subr.mxu0 0.0
    %219 = vmatpush2.msra.mxu0 0.0
    %220 = vmatprep.subr.mxu0 0.0
    %221 = vmatpush2.msra.mxu0 0.0
    %222 = vmatprep.subr.mxu0 0.0
    %223 = vmatpush2.msra.mxu0 0.0
    %224 = vmatprep.subr.mxu0 0.0
    %225 = vmatpush2.msra.mxu0 0.0
    %226 = vmatprep.subr.mxu0 0.0
    %227 = vmatpush2.msra.mxu0 0.0
    %228 = vmatprep.subr.mxu0 0.0
    %229 = vmatpush2.msra.mxu0 0.0
    %230 = vmatprep.subr.mxu0 0.0
    %231 = vmatpush2.msra.mxu0 0.0
    %232 = vmatprep.subr.mxu0 0.0
    %233 = vmatpush2.msra.mxu0 0.0
    %234 = vmatprep.mubr.f32.mxu0 0.0
    %235 = vmatmul.mubr.f32.gmra.mxu0 %v146
    %v236 = vpop.f32.mrf.mxu0
    %v237 = vadd.f32 %v168, %v236
    %v238 = vpop.f32.mrf.mxu0
    %239 = vdwg.mxu0
    %240 = vst [vmem:[#allocation8] sm:$0xff] %v237
    // Predicated region
    $region34: #{tpu_custom_call.1} parent=1 // pred_check
      _
    $region35: #{tpu_custom_call.1} parent=1 // pred_check_branch
      %242 = sbr.rel (0) target = $region37
    $region36: #{tpu_custom_call.1} parent=1 // pred_region
      %s244 = ssub.s32 128, 128
      %245 = vsyncadd [#allocation4], %s244
      %s247 = sshll.u32 [#allocation8], 4
      %s248 = int_to_ptr.vmem [resolvable:$true] %s247
      %250 = dma.vmem_to_hbm [thread:$0]  %s248, 128, %s5, [#allocation4]
    $region37: #{tpu_custom_call.1} parent=1 // pred_fallthru
      _
    // Predicated region
    $region38: #{tpu_custom_call.1} parent=1 // pred_check
      _
    $region39: #{tpu_custom_call.1} parent=1 // pred_check_branch
      %252 = sbr.rel (0) target = $region41
    $region40: #{tpu_custom_call.1} parent=1 // pred_region
      %253 = dma.done [#allocation4], 128
    $region41: #{tpu_custom_call.1} parent=1 // pred_fallthru
      _
    %254 = vsyncpa [#allocation3], 1
    %255 = vsyncpa [#allocation6], 1
    %256 = vsyncpa [#allocation4], 1

</llo_original>
